<compile_context>
chip_gen: v6e
topology: v6e:2x2x1
jax: 0.10.0
libtpu: 0.0.40
codegen_flags: <defaults>
</compile_context>

<pallas_src>
import functools

import jax
import jax.numpy as jnp
from jax.experimental import pallas as pl
from jax.experimental.pallas import tpu as pltpu


# ----------------------------------------------------------------------------
# Kernel
# ----------------------------------------------------------------------------
def _tsce_kernel(s_ref, t_ref, o_ref, *, epsilon, total_rows, tile_b,
                 exact_eps):
    # ---- Teacher softmax first: its temporaries die before the student path
    # starts, lowering peak VMEM liveness (review item: corrected estimator /
    # restructure for liveness).
    t = t_ref[...].astype(jnp.float32)
    t_max = jnp.max(t, axis=-1, keepdims=True)
    t_exp = jnp.exp(t - t_max)
    t_soft = t_exp * (1.0 / jnp.sum(t_exp, axis=-1, keepdims=True))

    # ---- Student path.
    s = s_ref[...].astype(jnp.float32)
    s_max = jnp.max(s, axis=-1, keepdims=True)
    s_shift = s - s_max
    s_exp = jnp.exp(s_shift)
    s_denom = jnp.sum(s_exp, axis=-1, keepdims=True)

    if exact_eps:
        # Exact PyTorch semantics: log(softmax(s) + eps), one log / element.
        s_soft = s_exp * (1.0 / s_denom)
        contrib = -(t_soft * jnp.log(s_soft + epsilon))
    else:
        # Log-softmax rewrite: one log / row, no per-element reciprocal.
        # NOTE: drops the "+eps" inside the log (deviates from the reference
        # only where softmax probabilities fall near/below ~1e-7).
        log_s = s_shift - jnp.log(s_denom)
        contrib = -(t_soft * log_s)

    # Mask padded rows of the last batch tile (must stay BEFORE the axis-0
    # reduction so garbage-row NaN/Inf cannot leak into the partial sums).
    if total_rows % tile_b != 0:
        row = pl.program_id(0) * tile_b + jax.lax.broadcasted_iota(
            jnp.int32, (tile_b, 1), 0)
        contrib = jnp.where(row < total_rows, contrib, 0.0)

    # Sublane-only reduction: per-class partial sums for this batch tile.
    partial = jnp.sum(contrib, axis=0, keepdims=True)        # (1, C_pad)
    o_ref[...] = partial[None]                                # (1, 1, C_pad)


# ----------------------------------------------------------------------------
# Tiling / budget helpers
# ----------------------------------------------------------------------------
def _round_up(x, m):
    return ((x + m - 1) // m) * m


def _default_vmem_budget():
    """Per-generation scoped-VMEM limit (bytes) for this kernel."""
    cap = None
    try:
        info = pltpu.get_tpu_info()
        cap = getattr(info, "vmem_capacity_bytes", None)
    except Exception:
        cap = None
    if cap is None:
        cap = 64 * 1024 * 1024                 # conservative: assume v7x-sized
    if cap >= 100 * 1024 * 1024:               # v5e / v6e: 128 MiB physical
        return 96 * 1024 * 1024
    return 40 * 1024 * 1024                    # v7x: 64 MiB physical


def _pick_tile_b(batch, classes_padded, in_itemsize, vmem_budget_bytes):
    """Largest sublane-aligned batch tile that fits the VMEM budget, with at
    least two grid steps so the 'parallel' axis can split across TensorCores.
    """
    mult = {4: 8, 2: 16, 1: 32}.get(in_itemsize, 8)
    if batch <= mult:
        return batch  # block == full dim, always legal (single step anyway)

    # Per batch-row VMEM cost:
    #   2 inputs x 2 pipeline buffers x C_pad x itemsize (BlockSpec double buf)
    # + ~6 live f32 (tile_b, C_pad) temporaries (f32 upcasts of s/t, the exps,
    #   t_soft, contrib) -- corrected from the previous undercount of 4.
    bytes_per_row = classes_padded * (4 * in_itemsize + 6 * 4)
    cap = (vmem_budget_bytes // bytes_per_row) // mult * mult
    cap = min(cap, 2048)

    # Guarantee >= 2 grid steps (megacore split on v7x; harmless elsewhere).
    half = _round_up(pl.cdiv(batch, 2), mult)
    cap = min(cap, half)

    tile = min(cap, _round_up(batch, mult))
    if tile < mult:
        # Even a minimum-height, full-C tile does not fit the budget.
        # TODO(synk): class-dim tiling (online softmax over a C grid axis) for
        # vocab-scale C; fall back to the smallest legal tile for now.
        tile = mult
    return tile


# ----------------------------------------------------------------------------
# Wrapper
# ----------------------------------------------------------------------------
def tsce_loss(student_out, teacher_out, epsilon=1e-8, *, tile_b=None,
              vmem_limit_bytes=None, exact_eps=None, cast_to_bf16=False):
    """Pallas implementation of TSCE_Loss.forward for 2-D [B, C] logits.

    exact_eps:
      True  -> exact PyTorch semantics log(softmax(s) + eps)  [default if eps>0]
      False -> log-softmax fast path (drops "+eps" inside the log; ~33% fewer
               EUP transcendentals, the binding unit on v7x).
    cast_to_bf16: optionally halve HBM traffic on memory-bound parts (v5e).
    """
    B, C = student_out.shape
    assert teacher_out.shape == (B, C)

    if exact_eps is None:
        exact_eps = epsilon > 0.0

    if cast_to_bf16 and student_out.dtype == jnp.float32:
        student_out = student_out.astype(jnp.bfloat16)
        teacher_out = teacher_out.astype(jnp.bfloat16)

    itemsize = jnp.dtype(student_out.dtype).itemsize

    # Pad the class dim to a multiple of 128 with a large negative fill so the
    # softmax is unchanged (exp -> 0, teacher prob exactly 0) and all vector
    # work / output stores are lane-dense and 128-aligned.
    C_pad = _round_up(C, 128)
    if C_pad != C:
        pad = ((0, 0), (0, C_pad - C))
        student_out = jnp.pad(student_out, pad, constant_values=-1e30)
        teacher_out = jnp.pad(teacher_out, pad, constant_values=-1e30)

    if vmem_limit_bytes is None:
        vmem_limit_bytes = _default_vmem_budget()

    if tile_b is None:
        # Leave ~25% headroom under the scoped VMEM limit.
        tile_b = _pick_tile_b(B, C_pad, itemsize, (vmem_limit_bytes * 3) // 4)
    num_tiles = pl.cdiv(B, tile_b)

    kernel = functools.partial(
        _tsce_kernel, epsilon=epsilon, total_rows=B, tile_b=tile_b,
        exact_eps=exact_eps)

    n_transcendental = (3 if exact_eps else 2) * B * C_pad
    cost = pl.CostEstimate(
        flops=8 * B * C_pad,
        transcendentals=n_transcendental,
        bytes_accessed=2 * B * C_pad * itemsize + num_tiles * C_pad * 4)

    partials = pl.pallas_call(
        kernel,
        out_shape=jax.ShapeDtypeStruct((num_tiles, 1, C_pad), jnp.float32),
        grid_spec=pltpu.PrefetchScalarGridSpec(
            num_scalar_prefetch=0,
            grid=(num_tiles,),
            in_specs=[
                pl.BlockSpec((tile_b, C_pad), lambda i: (i, 0)),
                pl.BlockSpec((tile_b, C_pad), lambda i: (i, 0)),
            ],
            out_specs=pl.BlockSpec((1, 1, C_pad), lambda i: (i, 0, 0)),
        ),
        compiler_params=pltpu.CompilerParams(
            # No carried accumulator -> batch tiles are independent, so the
            # grid axis can be split across TensorCores (v7x megacore).
            dimension_semantics=("parallel",),
            vmem_limit_bytes=vmem_limit_bytes,
        ),
        cost_estimate=cost,
    )(student_out, teacher_out)

    # Tiny final cross-lane reduction + mean over the batch in plain XLA.
    # (Padded class columns contribute exactly 0.)
    return jnp.sum(partials) / jnp.float32(B)


# ----------------------------------------------------------------------------
# Pure-JAX references
# ----------------------------------------------------------------------------
def tsce_loss_ref(student_out, teacher_out, epsilon=1e-8):
    s = jax.nn.softmax(student_out.astype(jnp.float32), axis=-1)
    t = jax.nn.softmax(teacher_out.astype(jnp.float32), axis=-1)
    return jnp.mean(-jnp.sum(t * jnp.log(s + epsilon), axis=1))


def tsce_loss_logsoftmax_ref(student_out, teacher_out):
    log_s = jax.nn.log_softmax(student_out.astype(jnp.float32), axis=-1)
    t = jax.nn.softmax(teacher_out.astype(jnp.float32), axis=-1)
    return jnp.mean(-jnp.sum(t * log_s, axis=1))


# ----------------------------------------------------------------------------
# Self-test
# ----------------------------------------------------------------------------
if __name__ == "__main__":
    key = jax.random.PRNGKey(0)
    epsilon = 1e-8
    k1, k2, k3, k4 = jax.random.split(key, 4)

    # Case 1: small f32 logits, 128-aligned C, exact-eps path (default).
    B1, C1 = 16, 128
    s1 = jax.random.normal(k1, (B1, C1), dtype=jnp.float32)
    t1 = jax.random.normal(k2, (B1, C1), dtype=jnp.float32)
    out1 = jax.block_until_ready(tsce_loss(s1, t1, epsilon=epsilon))
    ref1 = tsce_loss_ref(s1, t1, epsilon=epsilon)
    assert jnp.allclose(out1, ref1, rtol=1e-5, atol=1e-6), (out1, ref1)

    # Case 2: bf16 logits, batch not a multiple of the tile (masked remainder),
    # class dim not a multiple of 128 (wrapper pads 200 -> 256).
    B2, C2 = 52, 200
    s2 = jax.random.normal(k3, (B2, C2), dtype=jnp.bfloat16)
    t2 = jax.random.normal(k4, (B2, C2), dtype=jnp.bfloat16)
    out2 = jax.block_until_ready(tsce_loss(s2, t2, epsilon=epsilon))
    ref2 = tsce_loss_ref(s2, t2, epsilon=epsilon)
    assert jnp.allclose(out2, ref2, rtol=1e-4, atol=1e-5), (out2, ref2)

    # Case 3: log-softmax fast path (review-recommended for EUP-bound v7x).
    # Matches the eps-free reference tightly and the eps reference loosely.
    out3 = jax.block_until_ready(
        tsce_loss(s1, t1, epsilon=epsilon, exact_eps=False))
    ref3 = tsce_loss_logsoftmax_ref(s1, t1)
    assert jnp.allclose(out3, ref3, rtol=1e-5, atol=1e-6), (out3, ref3)
    assert jnp.allclose(out3, ref1, rtol=1e-3, atol=1e-3), (out3, ref1)

    print("KERNEL_OK")
</pallas_src>

<mosaic_0001>
module attributes {stable_mosaic.version = 11 : i64} {
  func.func @_tsce_kernel(%arg0: i32, %arg1: memref<8x128xf32, #tpu.memory_space<vmem>>, %arg2: memref<8x128xf32, #tpu.memory_space<vmem>>, %arg3: memref<1x1x128xf32, #tpu.memory_space<vmem>>) attributes {dimension_semantics = [#tpu.dimension_semantics<parallel>], iteration_bounds = array<i64: 2>, scalar_prefetch = 0 : i64, scratch_operands = 0 : i64, tpu.core_type = #tpu.core_type<tc>, window_params = [{transform_indices = @transform_0, window_bounds = array<i64: 8, 128>}, {transform_indices = @transform_1, window_bounds = array<i64: 8, 128>}, {transform_indices = @transform_2, window_bounds = array<i64: 1, 1, 128>}]} {
    %c0 = arith.constant 0 : index
    %c0_0 = arith.constant 0 : index
    %0 = vector.load %arg2[%c0, %c0_0] : memref<8x128xf32, #tpu.memory_space<vmem>>, vector<8x128xf32>
    %cst = arith.constant dense<0xFF800000> : vector<8xf32>
    %1 = vector.multi_reduction <maximumf>, %0, %cst [1] : vector<8x128xf32> to vector<8xf32>
    %2 = vector.shape_cast %1 : vector<8xf32> to vector<8x1xf32>
    %3 = vector.broadcast %2 : vector<8x1xf32> to vector<8x128xf32>
    %4 = arith.subf %0, %3 : vector<8x128xf32>
    %5 = math.exp %4 : vector<8x128xf32>
    %cst_1 = arith.constant dense<0.000000e+00> : vector<8xf32>
    %6 = vector.multi_reduction <add>, %5, %cst_1 [1] : vector<8x128xf32> to vector<8xf32>
    %7 = vector.shape_cast %6 : vector<8xf32> to vector<8x1xf32>
    %cst_2 = arith.constant 1.000000e+00 : f32
    %8 = vector.broadcast %cst_2 : f32 to vector<8x1xf32>
    %9 = arith.divf %8, %7 : vector<8x1xf32>
    %10 = vector.broadcast %9 : vector<8x1xf32> to vector<8x128xf32>
    %11 = arith.mulf %5, %10 : vector<8x128xf32>
    %c0_3 = arith.constant 0 : index
    %c0_4 = arith.constant 0 : index
    %12 = vector.load %arg1[%c0_3, %c0_4] : memref<8x128xf32, #tpu.memory_space<vmem>>, vector<8x128xf32>
    %cst_5 = arith.constant dense<0xFF800000> : vector<8xf32>
    %13 = vector.multi_reduction <maximumf>, %12, %cst_5 [1] : vector<8x128xf32> to vector<8xf32>
    %14 = vector.shape_cast %13 : vector<8xf32> to vector<8x1xf32>
    %15 = vector.broadcast %14 : vector<8x1xf32> to vector<8x128xf32>
    %16 = arith.subf %12, %15 : vector<8x128xf32>
    %17 = math.exp %16 : vector<8x128xf32>
    %cst_6 = arith.constant dense<0.000000e+00> : vector<8xf32>
    %18 = vector.multi_reduction <add>, %17, %cst_6 [1] : vector<8x128xf32> to vector<8xf32>
    %19 = vector.shape_cast %18 : vector<8xf32> to vector<8x1xf32>
    %cst_7 = arith.constant 1.000000e+00 : f32
    %20 = vector.broadcast %cst_7 : f32 to vector<8x1xf32>
    %21 = arith.divf %20, %19 : vector<8x1xf32>
    %22 = vector.broadcast %21 : vector<8x1xf32> to vector<8x128xf32>
    %23 = arith.mulf %17, %22 : vector<8x128xf32>
    %cst_8 = arith.constant 9.99999993E-9 : f32
    %24 = vector.broadcast %cst_8 : f32 to vector<8x128xf32>
    %25 = arith.addf %23, %24 : vector<8x128xf32>
    %26 = math.log %25 : vector<8x128xf32>
    %27 = arith.mulf %11, %26 : vector<8x128xf32>
    %cst_9 = arith.constant 0.000000e+00 : f32
    %28 = vector.broadcast %cst_9 : f32 to vector<8x128xf32>
    %29 = arith.subf %28, %27 : vector<8x128xf32>
    %cst_10 = arith.constant dense<0.000000e+00> : vector<128xf32>
    %30 = vector.multi_reduction <add>, %29, %cst_10 [0] : vector<8x128xf32> to vector<128xf32>
    %31 = vector.shape_cast %30 : vector<128xf32> to vector<1x128xf32>
    %32 = vector.shape_cast %31 : vector<1x128xf32> to vector<1x1x128xf32>
    %c0_11 = arith.constant 0 : index
    %c0_12 = arith.constant 0 : index
    %c0_13 = arith.constant 0 : index
    %33 = vector.load %arg3[%c0_11, %c0_12, %c0_13] : memref<1x1x128xf32, #tpu.memory_space<vmem>>, vector<1x1x128xf32>
    tpu.vector_store %arg3[%c0_11, %c0_12, %c0_13], %32 {strides = array<i32>} : memref<1x1x128xf32, #tpu.memory_space<vmem>>, vector<1x1x128xf32>,
    return
  }
  func.func @transform_0(%arg0: i32) -> (i32, i32) {
    %c0_i32 = arith.constant 0 : i32
    %c0_i32_0 = arith.constant 0 : i32
    return %arg0, %c0_i32 : i32, i32
  }
  func.func @transform_1(%arg0: i32) -> (i32, i32) {
    %c0_i32 = arith.constant 0 : i32
    %c0_i32_0 = arith.constant 0 : i32
    return %arg0, %c0_i32 : i32, i32
  }
  func.func @transform_2(%arg0: i32) -> (i32, i32, i32) {
    %c0_i32 = arith.constant 0 : i32
    %c0_i32_0 = arith.constant 0 : i32
    %c0_i32_1 = arith.constant 0 : i32
    return %arg0, %c0_i32, %c0_i32_0 : i32, i32, i32
  }
}

</mosaic_0001>

<llo_original>
// kernel: tpu_custom_call.1
$region0: #{tpu_custom_call.1}
  #allocation0 [shape = 'u32[]', space=smem, size = 0x4, offset = 0x4, fixed_abs, tag = 'smem constant byte address 0x4 - core index']
  #allocation1 [shape = 'u32[144,128]{1,0:T(1,128)}', space=vmem, size = 0x12000, scoped, tag = 'internal scratch']
  %s0 = inlined_call_operand.hbm [shape: f32[16,128], index: 0, kind: input, shape index: {}]
  %s1 = inlined_call_operand.hbm [shape: f32[16,128], index: 1, kind: input, shape index: {}]
  %s2 = inlined_call_operand.hbm [shape: f32[2,1,128], index: 2, kind: output, shape index: {}]
  %s3 = sld [smem:[#allocation0]]
  $region49: #{tpu_custom_call.1} parent=0
    _
  %s5 = ssub.s32 1, %s3
  %s6 = scalar_select 0, %s5, %s3
  $region1: #{tpu_custom_call.1} parent=0
    #allocation2 [shape = 'u8[8192]{0}', space=vmem, size = 0x2000, scoped, tag = 'input window, operand 0']
    #allocation3 [shape = 's32[2]{0}', space=sflag, size = 0x8, scoped, tag = 'scoped memory for tpu_custom_call.1']
    #allocation4 [shape = 's32[2]{0}', space=sflag, size = 0x8, scoped, tag = 'scoped memory for tpu_custom_call.1']
    #allocation5 [shape = 'u8[8192]{0}', space=vmem, size = 0x2000, scoped, tag = 'input window, operand 1']
    #allocation6 [shape = 's32[2]{0}', space=sflag, size = 0x8, scoped, tag = 'scoped memory for tpu_custom_call.1']
    #allocation7 [shape = 'u8[1024]{0}', space=vmem, size = 0x400, scoped, tag = 'output window, operand 0']
    %7 = vsyncpa [#allocation3], 0
    %s8 = scalar_lea.sflag [#allocation3], 1
    %9 = vsyncpa %s8, 0
    %10 = vsyncpa [#allocation6], 0
    %s11 = scalar_lea.sflag [#allocation6], 1
    %12 = vsyncpa %s11, 0
    %13 = vsyncpa [#allocation4], 0
    %s14 = scalar_lea.sflag [#allocation4], 1
    %15 = vsyncpa %s14, 0
    loop: start=0, step=1, limit=4
    $region2: #{tpu_custom_call.1} parent=1 // loop_pre_header
      _
    $region3: #{tpu_custom_call.1} parent=1 // loop_header
      %s17 = sphi 0, %s21
      %p18 = scmp.ge.s32.totalorder %s17, 4
      %s27 = sphi 0, %s29
      %s30 = sphi 0, %s27
      %s31 = sphi 0, %s30
      %s47 = sphi 0, %s31
      %s53 = sphi 0, %s55
      %s56 = sphi 0, %s53
      %s57 = sphi 0, %s56
      %s73 = sphi 0, %s57
      %s79 = sphi 0, %s81
      %s82 = sphi 0, %s79
      %s83 = sphi 0, %s82
      %s99 = sphi 0, %s83
    $region4: #{tpu_custom_call.1} parent=1 // loop_header_branch
      %20 = sbr.rel (%p18) target = $region8
    $region5: #{tpu_custom_call.1} parent=1 // loop_body
      %s22 = ssub.s32 %s17, 1
      %s23 = ssub.s32 %s17, 2
      %s24 = sadd.s32 %s17, 1
      %s25 = ssub.s32 %s17, %s24
      %p26 = scmp.eq.s32.totalorder %s25, 0
      %s28 = sadd.s32 %s27, 1
      %s29 = scalar_select %p26, %s27, %s28
      %p32 = pneg %p26
      %p33 = scmp.eq.s32.totalorder %s17, 1
      %p34 = por %p32, %p33
      %p35 = scmp.ne.s32.totalorder %s27, %s30
      %p36 = scmp.eq.s32.totalorder %s17, 0
      %p37 = por %p35, %p36
      %p38 = scmp.ne.s32.totalorder %s27, %s30
      %p39 = scmp.eq.s32.totalorder %s22, 1
      %p40 = por %p38, %p39
      %p41 = scmp.ne.s32.totalorder %s30, %s31
      %p42 = scmp.eq.s32.totalorder %s22, 0
      %p43 = por %p41, %p42
      %p44 = scmp.ne.s32.totalorder %s30, %s31
      %p45 = scmp.eq.s32.totalorder %s23, 1
      %p46 = por %p44, %p45
      %p48 = scmp.ne.s32.totalorder %s31, %s47
      %p49 = scmp.eq.s32.totalorder %s23, 0
      %p50 = por %p48, %p49
      %s51 = ssub.s32 %s17, %s24
      %p52 = scmp.eq.s32.totalorder %s51, 0
      %s54 = sadd.s32 %s53, 1
      %s55 = scalar_select %p52, %s53, %s54
      %p58 = pneg %p52
      %p59 = scmp.eq.s32.totalorder %s17, 1
      %p60 = por %p58, %p59
      %p61 = scmp.ne.s32.totalorder %s53, %s56
      %p62 = scmp.eq.s32.totalorder %s17, 0
      %p63 = por %p61, %p62
      %p64 = scmp.ne.s32.totalorder %s53, %s56
      %p65 = scmp.eq.s32.totalorder %s22, 1
      %p66 = por %p64, %p65
      %p67 = scmp.ne.s32.totalorder %s56, %s57
      %p68 = scmp.eq.s32.totalorder %s22, 0
      %p69 = por %p67, %p68
      %p70 = scmp.ne.s32.totalorder %s56, %s57
      %p71 = scmp.eq.s32.totalorder %s23, 1
      %p72 = por %p70, %p71
      %p74 = scmp.ne.s32.totalorder %s57, %s73
      %p75 = scmp.eq.s32.totalorder %s23, 0
      %p76 = por %p74, %p75
      %s77 = ssub.s32 %s17, %s24
      %p78 = scmp.eq.s32.totalorder %s77, 0
      %s80 = sadd.s32 %s79, 1
      %s81 = scalar_select %p78, %s79, %s80
      %p84 = pneg %p78
      %p85 = scmp.eq.s32.totalorder %s17, 1
      %p86 = por %p84, %p85
      %p87 = scmp.ne.s32.totalorder %s79, %s82
      %p88 = scmp.eq.s32.totalorder %s17, 0
      %p89 = por %p87, %p88
      %p90 = scmp.ne.s32.totalorder %s79, %s82
      %p91 = scmp.eq.s32.totalorder %s22, 1
      %p92 = por %p90, %p91
      %p93 = scmp.ne.s32.totalorder %s82, %s83
      %p94 = scmp.eq.s32.totalorder %s22, 0
      %p95 = por %p93, %p94
      %p96 = scmp.ne.s32.totalorder %s82, %s83
      %p97 = scmp.eq.s32.totalorder %s23, 1
      %p98 = por %p96, %p97
      %p100 = scmp.ne.s32.totalorder %s83, %s99
      %p101 = scmp.eq.s32.totalorder %s23, 0
      %p102 = por %p100, %p101
      %p103 = scmp.le.s32.totalorder 1, %s17
      %p104 = scmp.lt.s32.totalorder %s17, 3
      %p105 = pnand %p103, %p104
      %p106 = pneg %p105
      // Predicated region
      $region9: #{tpu_custom_call.1} parent=5 // pred_check
        _
      $region10: #{tpu_custom_call.1} parent=5 // pred_check_branch
        %108 = sbr.rel (%p105) target = $region12
      $region11: #{tpu_custom_call.1} parent=5 // pred_region
        %s109 = ssub.s32 %s17, 1
      $region12: #{tpu_custom_call.1} parent=5 // pred_fallthru
        _
      %p110 = scmp.lt.s32.totalorder %s17, 2
      // Predicated region
      $region13: #{tpu_custom_call.1} parent=5 // pred_check
        %p111 = pneg %p110
      $region14: #{tpu_custom_call.1} parent=5 // pred_check_branch
        %113 = sbr.rel (%p111) target = $region16
      $region15: #{tpu_custom_call.1} parent=5 // pred_region
        // Predicated region
        $region17: #{tpu_custom_call.1} parent=15 // pred_check
          %p114 = pneg %p37
        $region18: #{tpu_custom_call.1} parent=15 // pred_check_branch
          %116 = sbr.rel (%p114) target = $region20
        $region19: #{tpu_custom_call.1} parent=15 // pred_region
          %s117 = sand.u32 %s27, 1
          %s118 = scalar_lea.sflag [#allocation3], %s117
          %s119 = sand.u32 %s27, 1
          %s120 = smul.addr %s119, 8
          %s121 = scalar_lea.vmem [#allocation2], %s120
          %s123 = ssub.s32 128, 128
          %124 = vsyncadd %s118, %s123
          %s125 = smul.addr %s17, 128
          %s126 = scalar_lea.hbm %s0, %s125
          %s128 = sshll.u32 %s121, 4
          %s129 = int_to_ptr.vmem [resolvable:$true] %s128
          %131 = dma.hbm_to_vmem [thread:$0]  %s126, 128, %s129, %s118
        $region20: #{tpu_custom_call.1} parent=15 // pred_fallthru
          _
        // Predicated region
        $region21: #{tpu_custom_call.1} parent=15 // pred_check
          %p132 = pneg %p63
        $region22: #{tpu_custom_call.1} parent=15 // pred_check_branch
          %134 = sbr.rel (%p132) target = $region24
        $region23: #{tpu_custom_call.1} parent=15 // pred_region
          %s135 = sand.u32 %s53, 1
          %s136 = scalar_lea.sflag [#allocation6], %s135
          %s137 = sand.u32 %s53, 1
          %s138 = smul.addr %s137, 8
          %s139 = scalar_lea.vmem [#allocation5], %s138
          %s141 = ssub.s32 128, 128
          %142 = vsyncadd %s136, %s141
          %s143 = smul.addr %s17, 128
          %s144 = scalar_lea.hbm %s1, %s143
          %s146 = sshll.u32 %s139, 4
          %s147 = int_to_ptr.vmem [resolvable:$true] %s146
          %149 = dma.hbm_to_vmem [thread:$0]  %s144, 128, %s147, %s136
        $region24: #{tpu_custom_call.1} parent=15 // pred_fallthru
          _
      $region16: #{tpu_custom_call.1} parent=5 // pred_fallthru
        _
      %p150 = scmp.le.s32.totalorder 1, %s17
      %p151 = scmp.lt.s32.totalorder %s17, 3
      %p152 = pnand %p150, %p151
      %p153 = pneg %p152
      // Predicated region
      $region25: #{tpu_custom_call.1} parent=5 // pred_check
        _
      $region26: #{tpu_custom_call.1} parent=5 // pred_check_branch
        %155 = sbr.rel (%p152) target = $region28
      $region27: #{tpu_custom_call.1} parent=5 // pred_region
        %s156 = ssub.s32 %s17, 1
        %s157 = sand.u32 %s30, 1
        %s158 = scalar_lea.sflag [#allocation3], %s157
        %s159 = sand.u32 %s30, 1
        %s160 = smul.addr %s159, 8
        %s161 = scalar_lea.vmem [#allocation2], %s160
        // Predicated region
        $region29: #{tpu_custom_call.1} parent=27 // pred_check
          %p162 = pneg %p43
        $region30: #{tpu_custom_call.1} parent=27 // pred_check_branch
          %164 = sbr.rel (%p162) target = $region32
        $region31: #{tpu_custom_call.1} parent=27 // pred_region
          %165 = dma.done %s158, 128
        $region32: #{tpu_custom_call.1} parent=27 // pred_fallthru
          _
        %s166 = sand.u32 %s56, 1
        %s167 = scalar_lea.sflag [#allocation6], %s166
        %s168 = sand.u32 %s56, 1
        %s169 = smul.addr %s168, 8
        %s170 = scalar_lea.vmem [#allocation5], %s169
        // Predicated region
        $region33: #{tpu_custom_call.1} parent=27 // pred_check
          %p171 = pneg %p69
        $region34: #{tpu_custom_call.1} parent=27 // pred_check_branch
          %173 = sbr.rel (%p171) target = $region36
        $region35: #{tpu_custom_call.1} parent=27 // pred_region
          %174 = dma.done %s167, 128
        $region36: #{tpu_custom_call.1} parent=27 // pred_fallthru
          _
        %s175 = sand.u32 %s30, 1
        %s176 = scalar_lea.sflag [#allocation3], %s175
        %s177 = sand.u32 %s30, 1
        %s178 = smul.addr %s177, 8
        %s179 = scalar_lea.vmem [#allocation2], %s178
        %p180 = pneg %p43
        %p181 = pneg %p40
        %s182 = sand.u32 %s56, 1
        %s183 = scalar_lea.sflag [#allocation6], %s182
        %s184 = sand.u32 %s56, 1
        %s185 = smul.addr %s184, 8
        %s186 = scalar_lea.vmem [#allocation5], %s185
        %p187 = pneg %p69
        %p188 = pneg %p66
        %p189 = pneg %p95
        %p190 = pneg %p92
        %s191 = sand.u32 %s82, 1
        %s192 = scalar_lea.sflag [#allocation4], %s191
        %s193 = sand.u32 %s82, 1
        %s194 = scalar_lea.vmem [#allocation7], %s193
        %v195 = vld [vmem:[%s170] sm:$0xff]
        %196 = vmax.xlane.f32.xlu0 %v195
        %v197 = vpop.xlane.xlu0 %196
        %v198 = vsub.f32 %v195, %v197
        %v199 = vmul.f32 %v198, 1.442695
        %v200 = vpow.pop %v199
        %201 = vadd.xlane.f32.xlu0 %v200
        %v202 = vpop.xlane.xlu0 %201
        %v203 = vrcp.pop %v202
        %v204 = vmul.f32 1.0, %v203
        %v205 = vmul.f32 %v200, %v204
        %v206 = vld [vmem:[%s161] sm:$0xff]
        %207 = vmax.xlane.f32.xlu0 %v206
        %v208 = vpop.xlane.xlu0 %207
        %v209 = vsub.f32 %v206, %v208
        %v210 = vmul.f32 %v209, 1.442695
        %v211 = vpow.pop %v210
        %212 = vadd.xlane.f32.xlu0 %v211
        %v213 = vpop.xlane.xlu0 %212
        %v214 = vrcp.pop %v213
        %v215 = vmul.f32 1.0, %v214
        %v216 = vmul.f32 %v211, %v215
        %v217 = vadd.f32 %v216, 1e-08
        %v218 = vlog2.pop %v217
        %v219 = vmul.f32 %v218, 0.6931472
        %v220 = vmul.f32 %v205, %v219
        %v221 = vsub.f32 0.0, %v220
        %v222 = vrot.slane %v221, 4
        %v223 = vadd.f32 %v221, %v222
        %v224 = vrot.slane %v223, 2
        %v225 = vadd.f32 %v223, %v224
        %v226 = vrot.slane %v225, 1
        %v227 = vadd.f32 %v225, %v226
        %228 = vst [vmem:[%s194] sm:$0x1] %v227
        %s229 = sand.u32 %s82, 1
        %s230 = scalar_lea.sflag [#allocation4], %s229
        %s231 = sand.u32 %s82, 1
        %s232 = scalar_lea.vmem [#allocation7], %s231
        // Predicated region
        $region37: #{tpu_custom_call.1} parent=27 // pred_check
          %p233 = pneg %p92
        $region38: #{tpu_custom_call.1} parent=27 // pred_check_branch
          %235 = sbr.rel (%p233) target = $region40
        $region39: #{tpu_custom_call.1} parent=27 // pred_region
          %s237 = ssub.s32 16, 16
          %238 = vsyncadd %s230, %s237
          %s239 = smul.addr %s22, 16
          %s240 = scalar_lea.hbm %s2, %s239
          %s242 = sshll.u32 %s232, 4
          %s243 = int_to_ptr.vmem [resolvable:$true] %s242
          %245 = dma.vmem_to_hbm [thread:$0]  %s243, 16, %s240, %s230
        $region40: #{tpu_custom_call.1} parent=27 // pred_fallthru
          _
      $region28: #{tpu_custom_call.1} parent=5 // pred_fallthru
        _
      %p246 = scmp.le.s32.totalorder 2, %s17
      // Predicated region
      $region41: #{tpu_custom_call.1} parent=5 // pred_check
        %p247 = pneg %p246
      $region42: #{tpu_custom_call.1} parent=5 // pred_check_branch
        %249 = sbr.rel (%p247) target = $region44
      $region43: #{tpu_custom_call.1} parent=5 // pred_region
        %s250 = ssub.s32 %s17, 2
        // Predicated region
        $region45: #{tpu_custom_call.1} parent=43 // pred_check
          %p251 = pneg %p98
        $region46: #{tpu_custom_call.1} parent=43 // pred_check_branch
          %253 = sbr.rel (%p251) target = $region48
        $region47: #{tpu_custom_call.1} parent=43 // pred_region
          %s254 = sand.u32 %s83, 1
          %s255 = scalar_lea.sflag [#allocation4], %s254
          %s256 = sand.u32 %s83, 1
          %s257 = scalar_lea.vmem [#allocation7], %s256
          %258 = dma.done %s255, 16
        $region48: #{tpu_custom_call.1} parent=43 // pred_fallthru
          _
      $region44: #{tpu_custom_call.1} parent=5 // pred_fallthru
        _
    $region6: #{tpu_custom_call.1} parent=1 // loop_footer
      %s21 = sadd.s32 1, %s17
    $region7: #{tpu_custom_call.1} parent=1 // loop_footer_branch
      %16 = sbr.rel target = $region3
    $region8: #{tpu_custom_call.1} parent=1 // loop_exit
      _
    %259 = vsyncpa [#allocation3], 1
    %s260 = scalar_lea.sflag [#allocation3], 1
    %261 = vsyncpa %s260, 1
    %262 = vsyncpa [#allocation6], 1
    %s263 = scalar_lea.sflag [#allocation6], 1
    %264 = vsyncpa %s263, 1
    %265 = vsyncpa [#allocation4], 1
    %s266 = scalar_lea.sflag [#allocation4], 1
    %267 = vsyncpa %s266, 1

</llo_original>
